<compile_context>
chip_gen: v5e
topology: v5e:2x2
jax: 0.10.0
libtpu: 0.0.40
codegen_flags: <defaults>
</compile_context>

<pallas_src>
import functools

import jax
import jax.numpy as jnp
from jax.experimental import pallas as pl
from jax.experimental.pallas import tpu as pltpu

# Python float, NOT a jnp scalar: a closed-over jnp array would be captured as a kernel
# constant and fail tracing ("captures constants ... pass them as inputs").
_NEG = -1.0e30


def _round_up(x, m):
    return (x + m - 1) // m * m


def one_batched_kernel(x_ref, wT_ref, b_ref, o_ref, *, bags, n, r_out8):
    """One grid step: `bags` bags of `n` instances each.

    x_ref : (bags * n, D)   flattened bag rows for this step
    wT_ref: (D, R_pad)      weight, pre-transposed, zero-padded lanes
    b_ref : (1, R_pad)      bias, padded lanes filled with -1e30 (never win the lane max)
    o_ref : (r_out8, bags)  selected logits, transposed so writeback is small and lane-dense
    """
    # Linear layer for every instance row: one (bags*n, D) x (D, R_pad) MXU matmul.
    logits2 = jnp.dot(x_ref[...], wT_ref[...],
                      preferred_element_type=jnp.float32) + b_ref[...]
    r_pad = logits2.shape[-1]
    logits = logits2.reshape(bags, n, r_pad)                            # (bags, n, R_pad)

    # Per-row max logit; padded bias lanes carry -1e30 so they never contribute.
    row_max = jnp.max(logits, axis=-1, keepdims=True)                   # (bags, n, 1)
    row_ids = jax.lax.broadcasted_iota(jnp.int32, row_max.shape, 1)     # (bags, n, 1)

    # First row attaining the per-bag best (ties -> lowest index == python list.index(max)).
    best = jnp.max(row_max, axis=1, keepdims=True)                      # (bags, 1, 1)
    first_idx = jnp.min(jnp.where(row_max >= best, row_ids, n),
                        axis=1, keepdims=True)                          # (bags, 1, 1)

    # Pull out the selected row with a masked max (no full-tile f32 multiply).
    sel = jnp.where(row_ids == first_idx, logits, _NEG)                 # (bags, n, R_pad)
    selected = jnp.max(sel, axis=1)                                     # (bags, R_pad)

    # Transpose + keep only the first r_out8 class sublanes: output traffic drops from
    # 128 f32 lanes/bag to r_out8 rows shared across all bags, store stays 128-lane wide.
    o_ref[...] = selected.T[:r_out8, :].astype(o_ref.dtype)


def prepare_params(weight, bias, r_pad=None):
    """One-time parameter prep (hoisted out of the forward): weight (R, D), bias (R,).

    Returns wT_pad (D, R_pad) f32 with zero-padded lanes and b_pad (1, R_pad) f32 with
    -1e30 in padded lanes, so padded logits can never influence the row-max selection.
    """
    R, D = weight.shape
    if r_pad is None:
        r_pad = _round_up(max(R, 1), 128)
    wT_pad = jnp.zeros((D, r_pad), jnp.float32).at[:, :R].set(weight.T.astype(jnp.float32))
    b_pad = jnp.full((1, r_pad), _NEG, jnp.float32).at[0, :R].set(bias.astype(jnp.float32))
    return wT_pad, b_pad


def _choose_bags_per_block(B, bags_per_step):
    if B <= bags_per_step:
        return _round_up(max(B, 1), 8)            # single grid step (full-dims exception)
    # Multi-step: 128-bag multiples keep the transposed output store fully lane-dense,
    # and capping at ceil(B/2) keeps >=2 grid steps so v7x can shard bags across its 2 TCs.
    return _round_up(min(bags_per_step, pl.cdiv(B, 2)), 128)


def one_forward_batched(x_bags, wT_pad, b_pad, rel_num, *, bags_per_step=512):
    """x_bags: (B, N, D) -> (B, rel_num) selected logits (one row per bag)."""
    B, N, D = x_bags.shape
    r_pad = wT_pad.shape[1]
    r_out8 = _round_up(max(rel_num, 1), 8)

    bb = _choose_bags_per_block(B, bags_per_step)
    B_pad = _round_up(B, bb)

    # Pad only the bag axis (padded bags' outputs are sliced away below). No per-bag row
    # padding and no extra copy at all when B is already a multiple of bb.
    if B_pad != B:
        x_bags = jnp.pad(x_bags, ((0, B_pad - B), (0, 0), (0, 0)))
    x_flat = x_bags.reshape(B_pad * N, D)         # free reshape of contiguous dims

    grid = (B_pad // bb,)
    kernel = functools.partial(one_batched_kernel, bags=bb, n=N, r_out8=r_out8)

    bytes_accessed = (x_flat.size * x_flat.dtype.itemsize
                      + 4 * (wT_pad.size + b_pad.size + r_out8 * B_pad))
    out_t = pl.pallas_call(
        kernel,
        out_shape=jax.ShapeDtypeStruct((r_out8, B_pad), jnp.float32),
        grid_spec=pltpu.PrefetchScalarGridSpec(
            num_scalar_prefetch=0,
            grid=grid,
            in_specs=[
                pl.BlockSpec((bb * N, D), lambda i: (i, 0)),   # this step's bag rows
                pl.BlockSpec((D, r_pad), lambda i: (0, 0)),    # weight, resident
                pl.BlockSpec((1, r_pad), lambda i: (0, 0)),    # bias, resident
            ],
            out_specs=pl.BlockSpec((r_out8, bb), lambda i: (0, i)),
        ),
        compiler_params=pltpu.CompilerParams(
            dimension_semantics=("parallel",)),                # shard bag axis across TCs (v7x)
        cost_estimate=pl.CostEstimate(
            flops=2 * B_pad * N * D * r_pad,
            transcendentals=0,
            bytes_accessed=bytes_accessed),
    )(x_flat, wT_pad, b_pad)

    # (r_out8, B_pad) -> (B, rel_num): cheap XLA slice + transpose; padded bags/classes dropped.
    return out_t[:rel_num, :B].T


def one_forward(x, wT_pad, b_pad, rel_num):
    """Module-equivalent forward: single bag x (N, D) -> (1, rel_num).

    (A single tiny bag is cheaper in plain XLA in production; the Pallas path is kept here so
    the module-equivalent check exercises the kernel.)
    """
    return one_forward_batched(x[None], wT_pad, b_pad, rel_num)


# ----------------------------- pure-JAX references -----------------------------

def one_reference(x, weight, bias):
    logits = x @ weight.T + bias[None, :]
    if x.shape[0] > 1:
        idx = int(jnp.argmax(jnp.max(logits, axis=-1)))
        return logits[idx][None, :]
    return logits


def one_reference_batched(x_bags, weight, bias):
    logits = jnp.einsum('bnd,rd->bnr', x_bags, weight) + bias[None, None, :]
    idx = jnp.argmax(jnp.max(logits, axis=-1), axis=-1)                  # (B,)
    return jnp.take_along_axis(logits, idx[:, None, None], axis=1)[:, 0, :]


if __name__ == "__main__":
    # module-consistent small shapes: encoder_out_dimension=32, rel_num=8, bag size N=4
    N, D, R = 4, 32, 8

    key = jax.random.PRNGKey(0)
    kx, kw, kb, kb1, kb2 = jax.random.split(key, 5)

    bound = 1.0 / (D ** 0.5)
    weight = jax.random.uniform(kw, (R, D), minval=-bound, maxval=bound, dtype=jnp.float32)
    bias = jax.random.uniform(kb, (R,), minval=-bound, maxval=bound, dtype=jnp.float32)

    # one-time (hoisted) parameter prep: transpose + lane padding
    wT_pad, b_pad = prepare_params(weight, bias)

    # --- module-equivalent single-bag forward (N > 1 branch) ---
    x = jax.random.normal(kx, (N, D), dtype=jnp.float32)
    out = one_forward(x, wT_pad, b_pad, R)
    jax.block_until_ready(out)
    ref = one_reference(x, weight, bias)
    assert out.shape == (1, R), out.shape
    assert jnp.allclose(out, ref, atol=1e-5, rtol=1e-5), (out, ref)

    # --- N == 1 branch (same unified kernel path) ---
    out1 = one_forward(x[:1], wT_pad, b_pad, R)
    jax.block_until_ready(out1)
    ref1 = one_reference(x[:1], weight, bias)
    assert jnp.allclose(out1, ref1, atol=1e-5, rtol=1e-5), (out1, ref1)

    # --- batched throughput path: multi-step grid, 128 bags (512 rows) per step, 4 steps ---
    B = 512
    x_bags = jax.random.normal(kb1, (B, N, D), dtype=jnp.float32)
    out_b = one_forward_batched(x_bags, wT_pad, b_pad, R, bags_per_step=128)
    jax.block_until_ready(out_b)
    ref_b = one_reference_batched(x_bags, weight, bias)
    assert out_b.shape == (B, R), out_b.shape
    assert jnp.allclose(out_b, ref_b, atol=1e-5, rtol=1e-5)

    # --- non-divisible bag count (exercises the bag-axis padding path, 2 grid steps) ---
    B2 = 200
    x_bags2 = jax.random.normal(kb2, (B2, N, D), dtype=jnp.float32)
    out_b2 = one_forward_batched(x_bags2, wT_pad, b_pad, R, bags_per_step=64)
    jax.block_until_ready(out_b2)
    ref_b2 = one_reference_batched(x_bags2, weight, bias)
    assert out_b2.shape == (B2, R), out_b2.shape
    assert jnp.allclose(out_b2, ref_b2, atol=1e-5, rtol=1e-5)

    print("KERNEL_OK")
</pallas_src>

<mosaic_0001>
module attributes {stable_mosaic.version = 11 : i64} {
  func.func @one_batched_kernel(%arg0: i32, %arg1: memref<32x32xf32, #tpu.memory_space<vmem>>, %arg2: memref<32x128xf32, #tpu.memory_space<vmem>>, %arg3: memref<1x128xf32, #tpu.memory_space<vmem>>, %arg4: memref<8x8xf32, #tpu.memory_space<vmem>>) attributes {dimension_semantics = [#tpu.dimension_semantics<parallel>], iteration_bounds = array<i64: 1>, scalar_prefetch = 0 : i64, scratch_operands = 0 : i64, tpu.core_type = #tpu.core_type<tc>, window_params = [{transform_indices = @transform_0, window_bounds = array<i64: 32, 32>}, {pipeline_mode = #tpu.pipeline_mode<synchronous>, transform_indices = @transform_1, window_bounds = array<i64: 32, 128>}, {pipeline_mode = #tpu.pipeline_mode<synchronous>, transform_indices = @transform_2, window_bounds = array<i64: 1, 128>}, {transform_indices = @transform_3, window_bounds = array<i64: 8, 8>}]} {
    %c0 = arith.constant 0 : index
    %c0_0 = arith.constant 0 : index
    %0 = vector.load %arg1[%c0, %c0_0] : memref<32x32xf32, #tpu.memory_space<vmem>>, vector<32x32xf32>
    %c0_1 = arith.constant 0 : index
    %c0_2 = arith.constant 0 : index
    %1 = vector.load %arg2[%c0_1, %c0_2] : memref<32x128xf32, #tpu.memory_space<vmem>>, vector<32x128xf32>
    %cst = arith.constant dense<0.000000e+00> : vector<32x128xf32>
    %2 = tpu.matmul %0, %1, %cst {dimension_numbers = #tpu.dot_dimension_numbers<[1], [0], [0], [1], [0, 0, 1, 1], [], []>} : vector<32x32xf32>, vector<32x128xf32>, vector<32x128xf32> -> vector<32x128xf32>
    %c0_3 = arith.constant 0 : index
    %c0_4 = arith.constant 0 : index
    %3 = vector.load %arg3[%c0_3, %c0_4] : memref<1x128xf32, #tpu.memory_space<vmem>>, vector<1x128xf32>
    %4 = vector.broadcast %3 : vector<1x128xf32> to vector<32x128xf32>
    %5 = arith.addf %2, %4 : vector<32x128xf32>
    %6 = vector.shape_cast %5 : vector<32x128xf32> to vector<8x4x128xf32>
    %cst_5 = arith.constant dense<0xFF800000> : vector<8x4xf32>
    %7 = vector.multi_reduction <maximumf>, %6, %cst_5 [2] : vector<8x4x128xf32> to vector<8x4xf32>
    %8 = vector.shape_cast %7 : vector<8x4xf32> to vector<8x4x1xf32>
    %9 = tpu.iota {dimensions = array<i32: 1>} : vector<8x4x1xi32>
    %cst_6 = arith.constant dense<0xFF800000> : vector<8x1xf32>
    %10 = vector.multi_reduction <maximumf>, %8, %cst_6 [1] : vector<8x4x1xf32> to vector<8x1xf32>
    %11 = vector.shape_cast %10 : vector<8x1xf32> to vector<8x1x1xf32>
    %12 = vector.broadcast %11 : vector<8x1x1xf32> to vector<8x4x1xf32>
    %13 = arith.cmpf oge, %8, %12 : vector<8x4x1xf32>
    %c4_i32 = arith.constant 4 : i32
    %14 = vector.broadcast %c4_i32 : i32 to vector<8x4x1xi32>
    %15 = arith.select %13, %9, %14 : vector<8x4x1xi1>, vector<8x4x1xi32>
    %cst_7 = arith.constant dense<2147483647> : vector<8x1xi32>
    %16 = vector.multi_reduction <minsi>, %15, %cst_7 [1] : vector<8x4x1xi32> to vector<8x1xi32>
    %17 = vector.shape_cast %16 : vector<8x1xi32> to vector<8x1x1xi32>
    %18 = vector.broadcast %17 : vector<8x1x1xi32> to vector<8x4x1xi32>
    %19 = arith.cmpi eq, %9, %18 : vector<8x4x1xi32>
    %cst_8 = arith.constant -1.000000e+30 : f32
    %20 = vector.shape_cast %19 : vector<8x4x1xi1> to vector<8x4x1xi1>
    %21 = vector.broadcast %20 : vector<8x4x1xi1> to vector<8x4x128xi1>
    %22 = vector.broadcast %cst_8 : f32 to vector<8x4x128xf32>
    %23 = arith.select %21, %6, %22 : vector<8x4x128xi1>, vector<8x4x128xf32>
    %cst_9 = arith.constant dense<0xFF800000> : vector<8x128xf32>
    %24 = vector.multi_reduction <maximumf>, %23, %cst_9 [1] : vector<8x4x128xf32> to vector<8x128xf32>
    %25 = tpu.transpose %24, [1, 0] : vector<8x128xf32> -> vector<128x8xf32>
    %26 = vector.extract_strided_slice %25 {offsets = [0, 0], sizes = [8, 8], strides = [1, 1]} : vector<128x8xf32> to vector<8x8xf32>
    %c0_10 = arith.constant 0 : index
    %c0_11 = arith.constant 0 : index
    %27 = vector.load %arg4[%c0_10, %c0_11] : memref<8x8xf32, #tpu.memory_space<vmem>>, vector<8x8xf32>
    tpu.vector_store %arg4[%c0_10, %c0_11], %26 {strides = array<i32>} : memref<8x8xf32, #tpu.memory_space<vmem>>, vector<8x8xf32>,
    return
  }
  func.func @transform_0(%arg0: i32) -> (i32, i32) {
    %c0_i32 = arith.constant 0 : i32
    %c0_i32_0 = arith.constant 0 : i32
    return %arg0, %c0_i32 : i32, i32
  }
  func.func @transform_1(%arg0: i32) -> (i32, i32) {
    %c0_i32 = arith.constant 0 : i32
    %c0_i32_0 = arith.constant 0 : i32
    %c0_i32_1 = arith.constant 0 : i32
    return %c0_i32, %c0_i32_0 : i32, i32
  }
  func.func @transform_2(%arg0: i32) -> (i32, i32) {
    %c0_i32 = arith.constant 0 : i32
    %c0_i32_0 = arith.constant 0 : i32
    %c0_i32_1 = arith.constant 0 : i32
    return %c0_i32, %c0_i32_0 : i32, i32
  }
  func.func @transform_3(%arg0: i32) -> (i32, i32) {
    %c0_i32 = arith.constant 0 : i32
    %c0_i32_0 = arith.constant 0 : i32
    return %c0_i32, %arg0 : i32, i32
  }
}

</mosaic_0001>

<llo_original>
// kernel: tpu_custom_call.1
$region0: #{tpu_custom_call.1}
  #allocation0 [shape = 'u32[]', space=smem, size = 0x4, offset = 0x4, fixed_abs, tag = 'smem constant byte address 0x4 - core index']
  #allocation1 [shape = 'u32[72,128]{1,0:T(1,128)}', space=vmem, size = 0x9000, scoped, tag = 'internal scratch']
  %s0 = inlined_call_operand.hbm [shape: f32[32,32], index: 0, kind: input, shape index: {}]
  %s1 = inlined_call_operand.hbm [shape: f32[32,128], index: 1, kind: input, shape index: {}]
  %s2 = inlined_call_operand.vmem [shape: f32[1,128], index: 2, kind: input, shape index: {}]
  %s3 = inlined_call_operand.hbm [shape: f32[8,8], index: 3, kind: output, shape index: {}]
  %s4 = sld [smem:[#allocation0]]
  $region30: #{tpu_custom_call.1} parent=0
    _
  %s6 = ssub.s32 1, %s4
  %s7 = scalar_select 0, %s6, %s4
  $region1: #{tpu_custom_call.1} parent=0
    #allocation2 [shape = 'u8[16384]{0}', space=vmem, size = 0x4000, scoped, tag = 'input window, operand 0, single buffered']
    #allocation3 [shape = 's32[1]{0}', space=sflag, size = 0x4, scoped, tag = 'scoped memory for tpu_custom_call.1']
    #allocation4 [shape = 's32[1]{0}', space=sflag, size = 0x4, scoped, tag = 'scoped memory for tpu_custom_call.1']
    #allocation5 [shape = 'u8[16384]{0}', space=vmem, size = 0x4000, scoped, tag = 'input window, operand 1, single buffered']
    #allocation6 [shape = 's32[1]{0}', space=sflag, size = 0x4, scoped, tag = 'scoped memory for tpu_custom_call.1']
    #allocation7 [shape = 'u8[4096]{0}', space=vmem, size = 0x1000, scoped, tag = 'output window, operand 0, single buffered']
    %8 = vsyncpa [#allocation3], 0
    %9 = vsyncpa [#allocation6], 0
    %10 = vsyncpa [#allocation4], 0
    // Predicated region
    $region2: #{tpu_custom_call.1} parent=1 // pred_check
      _
    $region3: #{tpu_custom_call.1} parent=1 // pred_check_branch
      %12 = sbr.rel (0) target = $region5
    $region4: #{tpu_custom_call.1} parent=1 // pred_region
      %14 = vsyncadd [#allocation3], 0
      %s15 = sshll.u32 %s0, 4
      %s16 = int_to_ptr.hbm [resolvable:$true] %s15
      %s17 = sshll.u32 [#allocation2], 4
      %s18 = int_to_ptr.vmem [resolvable:$true] %s17
      %23 = dma.hbm_to_vmem [thread:$0]  %s16, 512, %s18, [#allocation3], 128, 128, 8
    $region5: #{tpu_custom_call.1} parent=1 // pred_fallthru
      _
    // Predicated region
    $region6: #{tpu_custom_call.1} parent=1 // pred_check
      _
    $region7: #{tpu_custom_call.1} parent=1 // pred_check_branch
      %25 = sbr.rel (0) target = $region9
    $region8: #{tpu_custom_call.1} parent=1 // pred_region
      %27 = vsyncadd [#allocation6], 0
      %s28 = sshll.u32 %s1, 4
      %s29 = int_to_ptr.hbm [resolvable:$true] %s28
      %s30 = sshll.u32 [#allocation5], 4
      %s31 = int_to_ptr.vmem [resolvable:$true] %s30
      %36 = dma.hbm_to_vmem [thread:$0]  %s29, 512, %s31, [#allocation6], 128, 128, 8
    $region9: #{tpu_custom_call.1} parent=1 // pred_fallthru
      _
    // Predicated region
    $region10: #{tpu_custom_call.1} parent=1 // pred_check
      _
    $region11: #{tpu_custom_call.1} parent=1 // pred_check_branch
      %38 = sbr.rel (0) target = $region13
    $region12: #{tpu_custom_call.1} parent=1 // pred_region
      _
    $region13: #{tpu_custom_call.1} parent=1 // pred_fallthru
      _
    // Predicated region
    $region14: #{tpu_custom_call.1} parent=1 // pred_check
      _
    $region15: #{tpu_custom_call.1} parent=1 // pred_check_branch
      %40 = sbr.rel (0) target = $region17
    $region16: #{tpu_custom_call.1} parent=1 // pred_region
      %42 = dma.done [#allocation3], 512
    $region17: #{tpu_custom_call.1} parent=1 // pred_fallthru
      _
    // Predicated region
    $region18: #{tpu_custom_call.1} parent=1 // pred_check
      _
    $region19: #{tpu_custom_call.1} parent=1 // pred_check_branch
      %44 = sbr.rel (0) target = $region21
    $region20: #{tpu_custom_call.1} parent=1 // pred_region
      %46 = dma.done [#allocation6], 512
    $region21: #{tpu_custom_call.1} parent=1 // pred_fallthru
      _
    %v47 = vld [vmem:[#allocation2] sm:$0xff]
    %v48 = vld [vmem:[#allocation2 + $0x8] sm:$0xff]
    %v49 = vld [vmem:[#allocation2 + $0x10] sm:$0xff]
    %v50 = vld [vmem:[#allocation2 + $0x18] sm:$0xff]
    %v51 = vld [vmem:[#allocation5] sm:$0xff]
    %v52 = vld [vmem:[#allocation5 + $0x8] sm:$0xff]
    %v53 = vld [vmem:[#allocation5 + $0x10] sm:$0xff]
    %v54 = vld [vmem:[#allocation5 + $0x18] sm:$0xff]
    %v55 = vld [vmem:[%s2] sm:$0x1]
    %v57 = vperm.slane %v55, 0
    %vm59 = vcmask 261120
    %v61 = vsel %vm59, %v47, 0
    %v64 = vsel %vm59, %v48, 0
    %v67 = vsel %vm59, %v49, 0
    %v70 = vsel %vm59, %v50, 0
    %72 = vmatpush.msra.mxu0 0.0
    %73 = vmatpush.msra.mxu0 0.0
    %74 = vmatpush.msra.mxu0 0.0
    %75 = vmatpush.msra.mxu0 0.0
    %76 = vmatpush.msra.mxu0 0.0
    %77 = vmatpush.msra.mxu0 0.0
    %78 = vmatpush.msra.mxu0 0.0
    %79 = vmatpush.msra.mxu0 0.0
    %80 = vmatpush.msra.mxu0 0.0
    %81 = vmatpush.msra.mxu0 0.0
    %82 = vmatpush.msra.mxu0 0.0
    %83 = vmatpush.msra.mxu0 0.0
    %84 = vmatpush.msra.mxu0 %v54
    %85 = vmatpush.msra.mxu0 %v53
    %86 = vmatpush.msra.mxu0 %v52
    %87 = vmatpush.msra.mxu0 %v51
    %88 = vmatmul.f32.gmra.mxu0 %v61
    %v89 = vpop.f32.mrf.mxu0
    %v90 = vadd.f32 %v57, %v89
    %91 = vmatmul.f32.gmra.mxu0 %v64
    %v92 = vpop.f32.mrf.mxu0
    %v93 = vadd.f32 %v57, %v92
    %94 = vmatmul.f32.gmra.mxu0 %v67
    %v95 = vpop.f32.mrf.mxu0
    %v96 = vadd.f32 %v57, %v95
    %97 = vmatmul.f32.gmra.mxu0 %v70
    %v98 = vpop.f32.mrf.mxu0
    %v99 = vadd.f32 %v57, %v98
    %100 = vdwg.mxu0
    %v105 = vrot.slane %v90, 4
    %v106 = vrot.slane %v93, 4
    %v107 = vrot.slane %v96, 4
    %v108 = vrot.slane %v99, 4
    %vm113 = vcmask 1043456
    %v114 = vsel %vm113, %v90, -inf
    %115 = vmax.xlane.f32.xlu0 %v114
    %v116 = vpop.xlane.xlu0 %115
    %v117 = vsel %vm113, %v105, -inf
    %118 = vmax.xlane.f32.xlu0 %v117
    %v119 = vpop.xlane.xlu0 %118
    %v120 = vsel %vm113, %v93, -inf
    %121 = vmax.xlane.f32.xlu0 %v120
    %v122 = vpop.xlane.xlu0 %121
    %v123 = vsel %vm113, %v106, -inf
    %124 = vmax.xlane.f32.xlu0 %v123
    %v125 = vpop.xlane.xlu0 %124
    %v126 = vsel %vm113, %v96, -inf
    %127 = vmax.xlane.f32.xlu0 %v126
    %v128 = vpop.xlane.xlu0 %127
    %v129 = vsel %vm113, %v107, -inf
    %130 = vmax.xlane.f32.xlu0 %v129
    %v131 = vpop.xlane.xlu0 %130
    %v132 = vsel %vm113, %v99, -inf
    %133 = vmax.xlane.f32.xlu0 %v132
    %v134 = vpop.xlane.xlu0 %133
    %v135 = vsel %vm113, %v108, -inf
    %136 = vmax.xlane.f32.xlu0 %v135
    %v137 = vpop.xlane.xlu0 %136
    %v138 = vlaneseq
    %v139 = vshrl.u32 %v138, 7
    %v140 = vsel %vm113, %v116, -inf
    %v141 = vrot.slane %v140, 4
    %v142 = vmax.f32 %v140, %v141
    %v143 = vrot.slane %v142, 2
    %v144 = vmax.f32 %v142, %v143
    %v145 = vrot.slane %v144, 1
    %v146 = vmax.f32 %v144, %v145
    %v147 = vsel %vm113, %v119, -inf
    %v148 = vrot.slane %v147, 4
    %v149 = vmax.f32 %v147, %v148
    %v150 = vrot.slane %v149, 2
    %v151 = vmax.f32 %v149, %v150
    %v152 = vrot.slane %v151, 1
    %v153 = vmax.f32 %v151, %v152
    %v154 = vsel %vm113, %v122, -inf
    %v155 = vrot.slane %v154, 4
    %v156 = vmax.f32 %v154, %v155
    %v157 = vrot.slane %v156, 2
    %v158 = vmax.f32 %v156, %v157
    %v159 = vrot.slane %v158, 1
    %v160 = vmax.f32 %v158, %v159
    %v161 = vsel %vm113, %v125, -inf
    %v162 = vrot.slane %v161, 4
    %v163 = vmax.f32 %v161, %v162
    %v164 = vrot.slane %v163, 2
    %v165 = vmax.f32 %v163, %v164
    %v166 = vrot.slane %v165, 1
    %v167 = vmax.f32 %v165, %v166
    %v168 = vsel %vm113, %v128, -inf
    %v169 = vrot.slane %v168, 4
    %v170 = vmax.f32 %v168, %v169
    %v171 = vrot.slane %v170, 2
    %v172 = vmax.f32 %v170, %v171
    %v173 = vrot.slane %v172, 1
    %v174 = vmax.f32 %v172, %v173
    %v175 = vsel %vm113, %v131, -inf
    %v176 = vrot.slane %v175, 4
    %v177 = vmax.f32 %v175, %v176
    %v178 = vrot.slane %v177, 2
    %v179 = vmax.f32 %v177, %v178
    %v180 = vrot.slane %v179, 1
    %v181 = vmax.f32 %v179, %v180
    %v182 = vsel %vm113, %v134, -inf
    %v183 = vrot.slane %v182, 4
    %v184 = vmax.f32 %v182, %v183
    %v185 = vrot.slane %v184, 2
    %v186 = vmax.f32 %v184, %v185
    %v187 = vrot.slane %v186, 1
    %v188 = vmax.f32 %v186, %v187
    %v189 = vsel %vm113, %v137, -inf
    %v190 = vrot.slane %v189, 4
    %v191 = vmax.f32 %v189, %v190
    %v192 = vrot.slane %v191, 2
    %v193 = vmax.f32 %v191, %v192
    %v194 = vrot.slane %v193, 1
    %v195 = vmax.f32 %v193, %v194
    %vm196 = vcmp.ge.f32.partialorder %v116, %v146
    %vm197 = vcmp.ge.f32.partialorder %v119, %v153
    %vm198 = vcmp.ge.f32.partialorder %v122, %v160
    %vm199 = vcmp.ge.f32.partialorder %v125, %v167
    %vm200 = vcmp.ge.f32.partialorder %v128, %v174
    %vm201 = vcmp.ge.f32.partialorder %v131, %v181
    %vm202 = vcmp.ge.f32.partialorder %v134, %v188
    %vm203 = vcmp.ge.f32.partialorder %v137, %v195
    %v204 = vsel %vm196, %v139, 4
    %v205 = vsel %vm197, %v139, 4
    %v206 = vsel %vm198, %v139, 4
    %v207 = vsel %vm199, %v139, 4
    %v208 = vsel %vm200, %v139, 4
    %v209 = vsel %vm201, %v139, 4
    %v210 = vsel %vm202, %v139, 4
    %v211 = vsel %vm203, %v139, 4
    %v212 = vsel %vm113, %v204, 2147483647
    %v213 = vrot.slane %v212, 4
    %vm214 = vcmp.lt.s32.totalorder %v212, %v213
    %v215 = vsel %vm214, %v212, %v213
    %v216 = vrot.slane %v215, 2
    %vm217 = vcmp.lt.s32.totalorder %v215, %v216
    %v218 = vsel %vm217, %v215, %v216
    %v219 = vrot.slane %v218, 1
    %vm220 = vcmp.lt.s32.totalorder %v218, %v219
    %v221 = vsel %vm220, %v218, %v219
    %v222 = vsel %vm113, %v205, 2147483647
    %v223 = vrot.slane %v222, 4
    %vm224 = vcmp.lt.s32.totalorder %v222, %v223
    %v225 = vsel %vm224, %v222, %v223
    %v226 = vrot.slane %v225, 2
    %vm227 = vcmp.lt.s32.totalorder %v225, %v226
    %v228 = vsel %vm227, %v225, %v226
    %v229 = vrot.slane %v228, 1
    %vm230 = vcmp.lt.s32.totalorder %v228, %v229
    %v231 = vsel %vm230, %v228, %v229
    %v232 = vsel %vm113, %v206, 2147483647
    %v233 = vrot.slane %v232, 4
    %vm234 = vcmp.lt.s32.totalorder %v232, %v233
    %v235 = vsel %vm234, %v232, %v233
    %v236 = vrot.slane %v235, 2
    %vm237 = vcmp.lt.s32.totalorder %v235, %v236
    %v238 = vsel %vm237, %v235, %v236
    %v239 = vrot.slane %v238, 1
    %vm240 = vcmp.lt.s32.totalorder %v238, %v239
    %v241 = vsel %vm240, %v238, %v239
    %v242 = vsel %vm113, %v207, 2147483647
    %v243 = vrot.slane %v242, 4
    %vm244 = vcmp.lt.s32.totalorder %v242, %v243
    %v245 = vsel %vm244, %v242, %v243
    %v246 = vrot.slane %v245, 2
    %vm247 = vcmp.lt.s32.totalorder %v245, %v246
    %v248 = vsel %vm247, %v245, %v246
    %v249 = vrot.slane %v248, 1
    %vm250 = vcmp.lt.s32.totalorder %v248, %v249
    %v251 = vsel %vm250, %v248, %v249
    %v252 = vsel %vm113, %v208, 2147483647
    %v253 = vrot.slane %v252, 4
    %vm254 = vcmp.lt.s32.totalorder %v252, %v253
    %v255 = vsel %vm254, %v252, %v253
    %v256 = vrot.slane %v255, 2
    %vm257 = vcmp.lt.s32.totalorder %v255, %v256
    %v258 = vsel %vm257, %v255, %v256
    %v259 = vrot.slane %v258, 1
    %vm260 = vcmp.lt.s32.totalorder %v258, %v259
    %v261 = vsel %vm260, %v258, %v259
    %v262 = vsel %vm113, %v209, 2147483647
    %v263 = vrot.slane %v262, 4
    %vm264 = vcmp.lt.s32.totalorder %v262, %v263
    %v265 = vsel %vm264, %v262, %v263
    %v266 = vrot.slane %v265, 2
    %vm267 = vcmp.lt.s32.totalorder %v265, %v266
    %v268 = vsel %vm267, %v265, %v266
    %v269 = vrot.slane %v268, 1
    %vm270 = vcmp.lt.s32.totalorder %v268, %v269
    %v271 = vsel %vm270, %v268, %v269
    %v272 = vsel %vm113, %v210, 2147483647
    %v273 = vrot.slane %v272, 4
    %vm274 = vcmp.lt.s32.totalorder %v272, %v273
    %v275 = vsel %vm274, %v272, %v273
    %v276 = vrot.slane %v275, 2
    %vm277 = vcmp.lt.s32.totalorder %v275, %v276
    %v278 = vsel %vm277, %v275, %v276
    %v279 = vrot.slane %v278, 1
    %vm280 = vcmp.lt.s32.totalorder %v278, %v279
    %v281 = vsel %vm280, %v278, %v279
    %v282 = vsel %vm113, %v211, 2147483647
    %v283 = vrot.slane %v282, 4
    %vm284 = vcmp.lt.s32.totalorder %v282, %v283
    %v285 = vsel %vm284, %v282, %v283
    %v286 = vrot.slane %v285, 2
    %vm287 = vcmp.lt.s32.totalorder %v285, %v286
    %v288 = vsel %vm287, %v285, %v286
    %v289 = vrot.slane %v288, 1
    %vm290 = vcmp.lt.s32.totalorder %v288, %v289
    %v291 = vsel %vm290, %v288, %v289
    %vm292 = vcmp.eq.s32.totalorder %v139, %v221
    %vm293 = vcmp.eq.s32.totalorder %v139, %v231
    %vm294 = vcmp.eq.s32.totalorder %v139, %v241
    %vm295 = vcmp.eq.s32.totalorder %v139, %v251
    %vm296 = vcmp.eq.s32.totalorder %v139, %v261
    %vm297 = vcmp.eq.s32.totalorder %v139, %v271
    %vm298 = vcmp.eq.s32.totalorder %v139, %v281
    %vm299 = vcmp.eq.s32.totalorder %v139, %v291
    %v300 = vsel %vm292, 1, 0
    %v301 = vsel %vm293, 1, 0
    %v302 = vsel %vm294, 1, 0
    %v303 = vsel %vm295, 1, 0
    %v304 = vsel %vm296, 1, 0
    %v305 = vsel %vm297, 1, 0
    %v306 = vsel %vm298, 1, 0
    %v307 = vsel %vm299, 1, 0
    %vm308 = vcmp.eq.s32.totalorder %v300, 1
    %vm309 = vcmp.eq.s32.totalorder %v301, 1
    %vm310 = vcmp.eq.s32.totalorder %v302, 1
    %vm311 = vcmp.eq.s32.totalorder %v303, 1
    %vm312 = vcmp.eq.s32.totalorder %v304, 1
    %vm313 = vcmp.eq.s32.totalorder %v305, 1
    %vm314 = vcmp.eq.s32.totalorder %v306, 1
    %vm315 = vcmp.eq.s32.totalorder %v307, 1
    %v316 = vsel %vm308, %v90, -1e+30
    %v317 = vsel %vm309, %v105, -1e+30
    %v318 = vsel %vm310, %v93, -1e+30
    %v319 = vsel %vm311, %v106, -1e+30
    %v320 = vsel %vm312, %v96, -1e+30
    %v321 = vsel %vm313, %v107, -1e+30
    %v322 = vsel %vm314, %v99, -1e+30
    %v323 = vsel %vm315, %v108, -1e+30
    %v324 = vsel %vm113, %v316, -inf
    %v325 = vrot.slane %v324, 4
    %v326 = vmax.f32 %v324, %v325
    %v327 = vrot.slane %v326, 2
    %v328 = vmax.f32 %v326, %v327
    %v329 = vrot.slane %v328, 1
    %v330 = vmax.f32 %v328, %v329
    %v331 = vsel %vm113, %v317, -inf
    %v332 = vrot.slane %v331, 4
    %v333 = vmax.f32 %v331, %v332
    %v334 = vrot.slane %v333, 2
    %v335 = vmax.f32 %v333, %v334
    %v336 = vrot.slane %v335, 1
    %v337 = vmax.f32 %v335, %v336
    %v338 = vsel %vm113, %v318, -inf
    %v339 = vrot.slane %v338, 4
    %v340 = vmax.f32 %v338, %v339
    %v341 = vrot.slane %v340, 2
    %v342 = vmax.f32 %v340, %v341
    %v343 = vrot.slane %v342, 1
    %v344 = vmax.f32 %v342, %v343
    %v345 = vsel %vm113, %v319, -inf
    %v346 = vrot.slane %v345, 4
    %v347 = vmax.f32 %v345, %v346
    %v348 = vrot.slane %v347, 2
    %v349 = vmax.f32 %v347, %v348
    %v350 = vrot.slane %v349, 1
    %v351 = vmax.f32 %v349, %v350
    %v352 = vsel %vm113, %v320, -inf
    %v353 = vrot.slane %v352, 4
    %v354 = vmax.f32 %v352, %v353
    %v355 = vrot.slane %v354, 2
    %v356 = vmax.f32 %v354, %v355
    %v357 = vrot.slane %v356, 1
    %v358 = vmax.f32 %v356, %v357
    %v359 = vsel %vm113, %v321, -inf
    %v360 = vrot.slane %v359, 4
    %v361 = vmax.f32 %v359, %v360
    %v362 = vrot.slane %v361, 2
    %v363 = vmax.f32 %v361, %v362
    %v364 = vrot.slane %v363, 1
    %v365 = vmax.f32 %v363, %v364
    %v366 = vsel %vm113, %v322, -inf
    %v367 = vrot.slane %v366, 4
    %v368 = vmax.f32 %v366, %v367
    %v369 = vrot.slane %v368, 2
    %v370 = vmax.f32 %v368, %v369
    %v371 = vrot.slane %v370, 1
    %v372 = vmax.f32 %v370, %v371
    %v373 = vsel %vm113, %v323, -inf
    %v374 = vrot.slane %v373, 4
    %v375 = vmax.f32 %v373, %v374
    %v376 = vrot.slane %v375, 2
    %v377 = vmax.f32 %v375, %v376
    %v378 = vrot.slane %v377, 1
    %v379 = vmax.f32 %v377, %v378
    %vm388 = vcmask 1041409
    %v389 = vsel %vm388, %v337, %v330
    %vm390 = vcmask 1042434
    %v391 = vsel %vm390, %v344, %v389
    %vm392 = vcmask 1043459
    %v393 = vsel %vm392, %v351, %v391
    %vm394 = vcmask 1044484
    %v395 = vsel %vm394, %v358, %v393
    %vm396 = vcmask 1045509
    %v397 = vsel %vm396, %v365, %v395
    %vm398 = vcmask 1046534
    %v399 = vsel %vm398, %v372, %v397
    %vm400 = vcmask 1047559
    %v401 = vsel %vm400, %v379, %v399
    %403 = vxpose.xlu0.b32.start [1/16] %v401, 128
    %404 = vxpose.xlu0.b32.cont [2/16] 0.0, 128
    %405 = vxpose.xlu0.b32.cont [3/16] 0.0, 128
    %406 = vxpose.xlu0.b32.cont [4/16] 0.0, 128
    %407 = vxpose.xlu0.b32.cont [5/16] 0.0, 128
    %408 = vxpose.xlu0.b32.cont [6/16] 0.0, 128
    %409 = vxpose.xlu0.b32.cont [7/16] 0.0, 128
    %410 = vxpose.xlu0.b32.cont [8/16] 0.0, 128
    %411 = vxpose.xlu0.b32.cont [9/16] 0.0, 128
    %412 = vxpose.xlu0.b32.cont [10/16] 0.0, 128
    %413 = vxpose.xlu0.b32.cont [11/16] 0.0, 128
    %414 = vxpose.xlu0.b32.cont [12/16] 0.0, 128
    %415 = vxpose.xlu0.b32.cont [13/16] 0.0, 128
    %416 = vxpose.xlu0.b32.cont [14/16] 0.0, 128
    %417 = vxpose.xlu0.b32.cont [15/16] 0.0, 128
    %418 = vxpose.xlu0.b32.end [16/16] 0.0, 128
    %v419 = vpop.trf.xlu0
    %v420 = vpop.trf.xlu0
    %v421 = vpop.trf.xlu0
    %v422 = vpop.trf.xlu0
    %v423 = vpop.trf.xlu0
    %v424 = vpop.trf.xlu0
    %v425 = vpop.trf.xlu0
    %v426 = vpop.trf.xlu0
    %v427 = vpop.trf.xlu0
    %v428 = vpop.trf.xlu0
    %v429 = vpop.trf.xlu0
    %v430 = vpop.trf.xlu0
    %v431 = vpop.trf.xlu0
    %v432 = vpop.trf.xlu0
    %v433 = vpop.trf.xlu0
    %v434 = vpop.trf.xlu0
    %vm435 = vcmask 64512
    %436 = vst.msk [vmem:[#allocation7] sm:$0xff] %vm435, %v419
    // Predicated region
    $region22: #{tpu_custom_call.1} parent=1 // pred_check
      _
    $region23: #{tpu_custom_call.1} parent=1 // pred_check_branch
      %438 = sbr.rel (0) target = $region25
    $region24: #{tpu_custom_call.1} parent=1 // pred_region
      %440 = vsyncadd [#allocation4], 0
      %s442 = sshll.u32 [#allocation7], 4
      %s443 = int_to_ptr.vmem [resolvable:$true] %s442
      %s444 = sshll.u32 %s3, 4
      %s445 = int_to_ptr.hbm [resolvable:$true] %s444
      %447 = dma.vmem_to_hbm [thread:$0]  %s443, 128, %s445, [#allocation4]
    $region25: #{tpu_custom_call.1} parent=1 // pred_fallthru
      _
    // Predicated region
    $region26: #{tpu_custom_call.1} parent=1 // pred_check
      _
    $region27: #{tpu_custom_call.1} parent=1 // pred_check_branch
      %449 = sbr.rel (0) target = $region29
    $region28: #{tpu_custom_call.1} parent=1 // pred_region
      %451 = dma.done [#allocation4], 128
    $region29: #{tpu_custom_call.1} parent=1 // pred_fallthru
      _
    %452 = vsyncpa [#allocation3], 1
    %453 = vsyncpa [#allocation6], 1
    %454 = vsyncpa [#allocation4], 1

</llo_original>
